<compile_context>
chip_gen: v5e
topology: v5e:2x2
jax: 0.10.0
libtpu: 0.0.40
codegen_flags: <defaults>
</compile_context>

<pallas_src>
import jax
import jax.numpy as jnp
from jax.experimental import pallas as pl
from jax.experimental.pallas import tpu as pltpu


SUBLANE_BF16 = 16   # bf16 sublane packing -> batch tile must be a multiple of 16
H3_PAD = 128        # fc3 hidden dim padded 64 -> 128 (lane-dense h3, K=128 for fc4)


def mlp_kernel(x_ref, w1_ref, b1_ref, w2_ref, b2_ref,
               w3_ref, b3_ref, w4_ref, b4_ref, o_ref):
    """Fused 4-layer MLP tile: (Linear -> ReLU) x3 -> Linear.

    x arrives f32 and is cast to bf16 in-kernel (VPU has slack; avoids a
    separate HBM pass for the convert). Weights are bf16 (native MXU path),
    accumulation is f32 via preferred_element_type, biases are f32 added
    post-matmul. Dropout(0.3) = identity (eval mode).
    """
    x = x_ref[...].astype(jnp.bfloat16)

    h1 = jnp.dot(x, w1_ref[...], preferred_element_type=jnp.float32) + b1_ref[...]
    h1 = jnp.maximum(h1, 0.0).astype(jnp.bfloat16)            # relu(fc1); dropout = id

    h2 = jnp.dot(h1, w2_ref[...], preferred_element_type=jnp.float32) + b2_ref[...]
    h2 = jnp.maximum(h2, 0.0).astype(jnp.bfloat16)            # relu(fc2); dropout = id

    h3 = jnp.dot(h2, w3_ref[...], preferred_element_type=jnp.float32) + b3_ref[...]
    h3 = jnp.maximum(h3, 0.0).astype(jnp.bfloat16)            # relu(fc3); dropout = id

    out = jnp.dot(h3, w4_ref[...], preferred_element_type=jnp.float32) + b4_ref[...]
    o_ref[...] = out.astype(o_ref.dtype)                      # (tb, num_classes) store


def _round_up(n, m):
    return ((n + m - 1) // m) * m


def tuned_sensor_classifier(x, params, *, block_batch=1024):
    """Batch-gridded fused MLP: resident bf16 weights, narrow f32 output."""
    (w1, b1), (w2, b2), (w3, b3), (w4, b4) = params
    batch, input_size = x.shape
    num_classes = w4.shape[1]
    h1_dim, h2_dim, h3_dim = w1.shape[1], w2.shape[1], w3.shape[1]

    # --- pad fc3 hidden dim (64 -> 128): lane-dense h3, K=128 for the fc4 matmul.
    #     Zero-padded w3 columns / b3 entries -> padded h3 columns are relu(0)=0,
    #     and the matching w4 rows are zero, so the output is unchanged.
    h3p = _round_up(h3_dim, H3_PAD)
    w3p = jnp.zeros((w3.shape[0], h3p), jnp.float32).at[:, :h3_dim].set(w3)
    b3p = jnp.zeros((1, h3p), jnp.float32).at[:, :h3_dim].set(b3)
    w4p = jnp.zeros((h3p, num_classes), jnp.float32).at[:h3_dim, :].set(w4)

    # --- bf16 weights (f32 accumulation in-kernel); biases stay f32.
    w1b = w1.astype(jnp.bfloat16)
    w2b = w2.astype(jnp.bfloat16)
    w3b = w3p.astype(jnp.bfloat16)
    w4b = w4p.astype(jnp.bfloat16)

    # --- batch tile: multiple of 16 (bf16 sublanes), capped by block_batch and
    #     by half the batch so the grid has >= 2 steps when possible (v7x has
    #     2 TensorCores; a single-step grid leaves one idle).
    tb = _round_up(block_batch, SUBLANE_BF16)
    half = _round_up(pl.cdiv(batch, 2), SUBLANE_BF16)
    tb = min(tb, max(half, SUBLANE_BF16))
    b_pad = _round_up(batch, tb)
    if b_pad != batch:
        x = jnp.pad(x, ((0, b_pad - batch), (0, 0)))   # padded rows sliced off below

    grid = (b_pad // tb,)

    # Constant index_map -> weights/biases are DMA'd once and stay resident.
    const_map = lambda i: (0, 0)
    resident = lambda arr: pl.BlockSpec(arr.shape, const_map)

    flops = 2 * b_pad * (input_size * h1_dim + h1_dim * h2_dim
                         + h2_dim * h3p + h3p * num_classes)
    bytes_accessed = (x.size * 4
                      + (w1b.size + w2b.size + w3b.size + w4b.size) * 2
                      + (b1.size + b2.size + b3p.size + b4.size) * 4
                      + b_pad * num_classes * 4)

    out_padded = pl.pallas_call(
        mlp_kernel,
        out_shape=jax.ShapeDtypeStruct((b_pad, num_classes), jnp.float32),
        grid_spec=pltpu.PrefetchScalarGridSpec(
            num_scalar_prefetch=0,
            grid=grid,
            in_specs=[
                pl.BlockSpec((tb, input_size), lambda i: (i, 0)),   # x tile (f32)
                resident(w1b), resident(b1),
                resident(w2b), resident(b2),
                resident(w3b), resident(b3p),
                resident(w4b), resident(b4),
            ],
            # last dim == full array dim (num_classes) -> legal narrow block;
            # avoids the 128-wide padded writeback + post-kernel re-read.
            out_specs=pl.BlockSpec((tb, num_classes), lambda i: (i, 0)),
        ),
        compiler_params=pltpu.CompilerParams(
            dimension_semantics=("parallel",),      # megacore sharding on v7x
            vmem_limit_bytes=32 << 20,              # tb<=~2048 fits easily on all gens
        ),
        cost_estimate=pl.CostEstimate(
            flops=flops, transcendentals=0, bytes_accessed=bytes_accessed),
    )(x, w1b, b1, w2b, b2, w3b, b3p, w4b, b4)

    # Strip batch padding only; the class dimension is already exact.
    return out_padded[:batch]


def init_linear(key, in_features, out_features):
    """Deterministic PyTorch-style (Kaiming-uniform-ish) init.

    Returns W as (in_features, out_features) — already transposed relative to
    torch's (out, in) layout — and b as (1, out_features).
    """
    kw, kb = jax.random.split(key)
    bound = 1.0 / jnp.sqrt(jnp.float32(in_features))
    w = jax.random.uniform(kw, (in_features, out_features),
                           minval=-bound, maxval=bound, dtype=jnp.float32)
    b = jax.random.uniform(kb, (1, out_features),
                           minval=-bound, maxval=bound, dtype=jnp.float32)
    return w, b


if __name__ == "__main__":
    # Small, deterministic problem: batch=8 sensor rows, 32 features, 6 classes.
    # (At this size the kernel is latency-bound; the gridding/bf16/narrow-output
    #  changes pay off as batch grows.)
    batch = 8
    input_size = 32
    num_classes = 6

    key = jax.random.PRNGKey(0)
    kx, k1, k2, k3, k4 = jax.random.split(key, 5)

    x = jax.random.normal(kx, (batch, input_size), dtype=jnp.float32)

    params = (
        init_linear(k1, input_size, 256),   # fc1
        init_linear(k2, 256, 128),          # fc2
        init_linear(k3, 128, 64),           # fc3
        init_linear(k4, 64, num_classes),   # fc4
    )

    out = tuned_sensor_classifier(x, params)
    out = jax.block_until_ready(out)

    # Reference check in plain JAX f32 (eval-mode dropout = identity).
    # Tolerance relaxed because the kernel runs bf16 weights/activations.
    (w1, b1), (w2, b2), (w3, b3), (w4, b4) = params
    h = jnp.maximum(x @ w1 + b1, 0.0)
    h = jnp.maximum(h @ w2 + b2, 0.0)
    h = jnp.maximum(h @ w3 + b3, 0.0)
    ref = h @ w4 + b4

    assert out.shape == (batch, num_classes)
    assert jnp.allclose(out, ref, atol=5e-2, rtol=5e-2), (
        f"max abs err = {jnp.max(jnp.abs(out - ref))}")

    print("KERNEL_OK")
</pallas_src>

<mosaic_0001>
module attributes {stable_mosaic.version = 11 : i64} {
  func.func @mlp_kernel(%arg0: i32, %arg1: memref<16x32xf32, #tpu.memory_space<vmem>>, %arg2: memref<32x256xbf16, #tpu.memory_space<vmem>>, %arg3: memref<1x256xf32, #tpu.memory_space<vmem>>, %arg4: memref<256x128xbf16, #tpu.memory_space<vmem>>, %arg5: memref<1x128xf32, #tpu.memory_space<vmem>>, %arg6: memref<128x128xbf16, #tpu.memory_space<vmem>>, %arg7: memref<1x128xf32, #tpu.memory_space<vmem>>, %arg8: memref<128x6xbf16, #tpu.memory_space<vmem>>, %arg9: memref<1x6xf32, #tpu.memory_space<vmem>>, %arg10: memref<16x6xf32, #tpu.memory_space<vmem>>) attributes {dimension_semantics = [#tpu.dimension_semantics<parallel>], iteration_bounds = array<i64: 1>, scalar_prefetch = 0 : i64, scratch_operands = 0 : i64, tpu.core_type = #tpu.core_type<tc>, window_params = [{transform_indices = @transform_0, window_bounds = array<i64: 16, 32>}, {pipeline_mode = #tpu.pipeline_mode<synchronous>, transform_indices = @transform_1, window_bounds = array<i64: 32, 256>}, {pipeline_mode = #tpu.pipeline_mode<synchronous>, transform_indices = @transform_2, window_bounds = array<i64: 1, 256>}, {pipeline_mode = #tpu.pipeline_mode<synchronous>, transform_indices = @transform_3, window_bounds = array<i64: 256, 128>}, {pipeline_mode = #tpu.pipeline_mode<synchronous>, transform_indices = @transform_4, window_bounds = array<i64: 1, 128>}, {pipeline_mode = #tpu.pipeline_mode<synchronous>, transform_indices = @transform_5, window_bounds = array<i64: 128, 128>}, {pipeline_mode = #tpu.pipeline_mode<synchronous>, transform_indices = @transform_6, window_bounds = array<i64: 1, 128>}, {pipeline_mode = #tpu.pipeline_mode<synchronous>, transform_indices = @transform_7, window_bounds = array<i64: 128, 6>}, {pipeline_mode = #tpu.pipeline_mode<synchronous>, transform_indices = @transform_8, window_bounds = array<i64: 1, 6>}, {transform_indices = @transform_9, window_bounds = array<i64: 16, 6>}]} {
    %c0 = arith.constant 0 : index
    %c0_0 = arith.constant 0 : index
    %0 = vector.load %arg1[%c0, %c0_0] : memref<16x32xf32, #tpu.memory_space<vmem>>, vector<16x32xf32>
    %1 = arith.truncf %0 : vector<16x32xf32> to vector<16x32xbf16>
    %c0_1 = arith.constant 0 : index
    %c0_2 = arith.constant 0 : index
    %2 = vector.load %arg2[%c0_1, %c0_2] : memref<32x256xbf16, #tpu.memory_space<vmem>>, vector<32x256xbf16>
    %cst = arith.constant dense<0.000000e+00> : vector<16x256xf32>
    %3 = tpu.matmul %1, %2, %cst {dimension_numbers = #tpu.dot_dimension_numbers<[1], [0], [0], [1], [0, 0, 1, 1], [], []>} : vector<16x32xbf16>, vector<32x256xbf16>, vector<16x256xf32> -> vector<16x256xf32>
    %c0_3 = arith.constant 0 : index
    %c0_4 = arith.constant 0 : index
    %4 = vector.load %arg3[%c0_3, %c0_4] : memref<1x256xf32, #tpu.memory_space<vmem>>, vector<1x256xf32>
    %5 = vector.broadcast %4 : vector<1x256xf32> to vector<16x256xf32>
    %6 = arith.addf %3, %5 : vector<16x256xf32>
    %cst_5 = arith.constant 0.000000e+00 : f32
    %7 = vector.broadcast %cst_5 : f32 to vector<16x256xf32>
    %8 = arith.maximumf %6, %7 : vector<16x256xf32>
    %9 = arith.truncf %8 : vector<16x256xf32> to vector<16x256xbf16>
    %c0_6 = arith.constant 0 : index
    %c0_7 = arith.constant 0 : index
    %10 = vector.load %arg4[%c0_6, %c0_7] : memref<256x128xbf16, #tpu.memory_space<vmem>>, vector<256x128xbf16>
    %cst_8 = arith.constant dense<0.000000e+00> : vector<16x128xf32>
    %11 = tpu.matmul %9, %10, %cst_8 {dimension_numbers = #tpu.dot_dimension_numbers<[1], [0], [0], [1], [0, 0, 1, 1], [], []>} : vector<16x256xbf16>, vector<256x128xbf16>, vector<16x128xf32> -> vector<16x128xf32>
    %c0_9 = arith.constant 0 : index
    %c0_10 = arith.constant 0 : index
    %12 = vector.load %arg5[%c0_9, %c0_10] : memref<1x128xf32, #tpu.memory_space<vmem>>, vector<1x128xf32>
    %13 = vector.broadcast %12 : vector<1x128xf32> to vector<16x128xf32>
    %14 = arith.addf %11, %13 : vector<16x128xf32>
    %cst_11 = arith.constant 0.000000e+00 : f32
    %15 = vector.broadcast %cst_11 : f32 to vector<16x128xf32>
    %16 = arith.maximumf %14, %15 : vector<16x128xf32>
    %17 = arith.truncf %16 : vector<16x128xf32> to vector<16x128xbf16>
    %c0_12 = arith.constant 0 : index
    %c0_13 = arith.constant 0 : index
    %18 = vector.load %arg6[%c0_12, %c0_13] : memref<128x128xbf16, #tpu.memory_space<vmem>>, vector<128x128xbf16>
    %cst_14 = arith.constant dense<0.000000e+00> : vector<16x128xf32>
    %19 = tpu.matmul %17, %18, %cst_14 {dimension_numbers = #tpu.dot_dimension_numbers<[1], [0], [0], [1], [0, 0, 1, 1], [], []>} : vector<16x128xbf16>, vector<128x128xbf16>, vector<16x128xf32> -> vector<16x128xf32>
    %c0_15 = arith.constant 0 : index
    %c0_16 = arith.constant 0 : index
    %20 = vector.load %arg7[%c0_15, %c0_16] : memref<1x128xf32, #tpu.memory_space<vmem>>, vector<1x128xf32>
    %21 = vector.broadcast %20 : vector<1x128xf32> to vector<16x128xf32>
    %22 = arith.addf %19, %21 : vector<16x128xf32>
    %cst_17 = arith.constant 0.000000e+00 : f32
    %23 = vector.broadcast %cst_17 : f32 to vector<16x128xf32>
    %24 = arith.maximumf %22, %23 : vector<16x128xf32>
    %25 = arith.truncf %24 : vector<16x128xf32> to vector<16x128xbf16>
    %c0_18 = arith.constant 0 : index
    %c0_19 = arith.constant 0 : index
    %26 = vector.load %arg8[%c0_18, %c0_19] : memref<128x6xbf16, #tpu.memory_space<vmem>>, vector<128x6xbf16>
    %cst_20 = arith.constant dense<0.000000e+00> : vector<16x6xf32>
    %27 = tpu.matmul %25, %26, %cst_20 {dimension_numbers = #tpu.dot_dimension_numbers<[1], [0], [0], [1], [0, 0, 1, 1], [], []>} : vector<16x128xbf16>, vector<128x6xbf16>, vector<16x6xf32> -> vector<16x6xf32>
    %c0_21 = arith.constant 0 : index
    %c0_22 = arith.constant 0 : index
    %28 = vector.load %arg9[%c0_21, %c0_22] : memref<1x6xf32, #tpu.memory_space<vmem>>, vector<1x6xf32>
    %29 = vector.broadcast %28 : vector<1x6xf32> to vector<16x6xf32>
    %30 = arith.addf %27, %29 : vector<16x6xf32>
    %c0_23 = arith.constant 0 : index
    %c0_24 = arith.constant 0 : index
    %31 = vector.load %arg10[%c0_23, %c0_24] : memref<16x6xf32, #tpu.memory_space<vmem>>, vector<16x6xf32>
    tpu.vector_store %arg10[%c0_23, %c0_24], %30 {strides = array<i32>} : memref<16x6xf32, #tpu.memory_space<vmem>>, vector<16x6xf32>,
    return
  }
  func.func @transform_0(%arg0: i32) -> (i32, i32) {
    %c0_i32 = arith.constant 0 : i32
    %c0_i32_0 = arith.constant 0 : i32
    return %arg0, %c0_i32 : i32, i32
  }
  func.func @transform_1(%arg0: i32) -> (i32, i32) {
    %c0_i32 = arith.constant 0 : i32
    %c0_i32_0 = arith.constant 0 : i32
    %c0_i32_1 = arith.constant 0 : i32
    return %c0_i32, %c0_i32_0 : i32, i32
  }
  func.func @transform_2(%arg0: i32) -> (i32, i32) {
    %c0_i32 = arith.constant 0 : i32
    %c0_i32_0 = arith.constant 0 : i32
    %c0_i32_1 = arith.constant 0 : i32
    return %c0_i32, %c0_i32_0 : i32, i32
  }
  func.func @transform_3(%arg0: i32) -> (i32, i32) {
    %c0_i32 = arith.constant 0 : i32
    %c0_i32_0 = arith.constant 0 : i32
    %c0_i32_1 = arith.constant 0 : i32
    return %c0_i32, %c0_i32_0 : i32, i32
  }
  func.func @transform_4(%arg0: i32) -> (i32, i32) {
    %c0_i32 = arith.constant 0 : i32
    %c0_i32_0 = arith.constant 0 : i32
    %c0_i32_1 = arith.constant 0 : i32
    return %c0_i32, %c0_i32_0 : i32, i32
  }
  func.func @transform_5(%arg0: i32) -> (i32, i32) {
    %c0_i32 = arith.constant 0 : i32
    %c0_i32_0 = arith.constant 0 : i32
    %c0_i32_1 = arith.constant 0 : i32
    return %c0_i32, %c0_i32_0 : i32, i32
  }
  func.func @transform_6(%arg0: i32) -> (i32, i32) {
    %c0_i32 = arith.constant 0 : i32
    %c0_i32_0 = arith.constant 0 : i32
    %c0_i32_1 = arith.constant 0 : i32
    return %c0_i32, %c0_i32_0 : i32, i32
  }
  func.func @transform_7(%arg0: i32) -> (i32, i32) {
    %c0_i32 = arith.constant 0 : i32
    %c0_i32_0 = arith.constant 0 : i32
    %c0_i32_1 = arith.constant 0 : i32
    return %c0_i32, %c0_i32_0 : i32, i32
  }
  func.func @transform_8(%arg0: i32) -> (i32, i32) {
    %c0_i32 = arith.constant 0 : i32
    %c0_i32_0 = arith.constant 0 : i32
    %c0_i32_1 = arith.constant 0 : i32
    return %c0_i32, %c0_i32_0 : i32, i32
  }
  func.func @transform_9(%arg0: i32) -> (i32, i32) {
    %c0_i32 = arith.constant 0 : i32
    %c0_i32_0 = arith.constant 0 : i32
    return %arg0, %c0_i32 : i32, i32
  }
}

</mosaic_0001>

<llo_original>
// kernel: tpu_custom_call.1
$region0: #{tpu_custom_call.1}
  #allocation0 [shape = 'u32[]', space=smem, size = 0x4, offset = 0x4, fixed_abs, tag = 'smem constant byte address 0x4 - core index']
  #allocation1 [shape = 'u32[72,128]{1,0:T(1,128)}', space=vmem, size = 0x9000, scoped, tag = 'internal scratch']
  %s0 = inlined_call_operand.hbm [shape: f32[16,32], index: 0, kind: input, shape index: {}]
  %s1 = inlined_call_operand.hbm [shape: bf16[32,256], index: 1, kind: input, shape index: {}]
  %s2 = inlined_call_operand.vmem [shape: f32[1,256], index: 2, kind: input, shape index: {}]
  %s3 = inlined_call_operand.hbm [shape: bf16[256,128], index: 3, kind: input, shape index: {}]
  %s4 = inlined_call_operand.vmem [shape: f32[1,128], index: 4, kind: input, shape index: {}]
  %s5 = inlined_call_operand.vmem [shape: bf16[128,128], index: 5, kind: input, shape index: {}]
  %s6 = inlined_call_operand.vmem [shape: f32[1,128], index: 6, kind: input, shape index: {}]
  %s7 = inlined_call_operand.vmem [shape: bf16[128,6], index: 7, kind: input, shape index: {}]
  %s8 = inlined_call_operand.vmem [shape: f32[1,6], index: 8, kind: input, shape index: {}]
  %s9 = inlined_call_operand.vmem [shape: f32[16,6], index: 9, kind: output, shape index: {}]
  %s10 = sld [smem:[#allocation0]]
  $region58: #{tpu_custom_call.1} parent=0
    _
  %s12 = ssub.s32 1, %s10
  %s13 = scalar_select 0, %s12, %s10
  $region1: #{tpu_custom_call.1} parent=0
    #allocation2 [shape = 'u8[8192]{0}', space=vmem, size = 0x2000, scoped, tag = 'input window, operand 0, single buffered']
    #allocation3 [shape = 's32[1]{0}', space=sflag, size = 0x4, scoped, tag = 'scoped memory for tpu_custom_call.1']
    #allocation4 [shape = 'u8[16384]{0}', space=vmem, size = 0x4000, scoped, tag = 'input window, operand 1, single buffered']
    #allocation5 [shape = 's32[1]{0}', space=sflag, size = 0x4, scoped, tag = 'scoped memory for tpu_custom_call.1']
    #allocation6 [shape = 'u8[65536]{0}', space=vmem, size = 0x10000, scoped, tag = 'input window, operand 3, single buffered']
    %14 = vsyncpa [#allocation3], 0
    %15 = vsyncpa [#allocation5], 0
    // Predicated region
    $region2: #{tpu_custom_call.1} parent=1 // pred_check
      _
    $region3: #{tpu_custom_call.1} parent=1 // pred_check_branch
      %17 = sbr.rel (0) target = $region5
    $region4: #{tpu_custom_call.1} parent=1 // pred_region
      %19 = vsyncadd [#allocation3], 0
      %s20 = sshll.u32 %s0, 4
      %s21 = int_to_ptr.hbm [resolvable:$true] %s20
      %s22 = sshll.u32 [#allocation2], 4
      %s23 = int_to_ptr.vmem [resolvable:$true] %s22
      %28 = dma.hbm_to_vmem [thread:$0]  %s21, 256, %s23, [#allocation3], 128, 128, 8
    $region5: #{tpu_custom_call.1} parent=1 // pred_fallthru
      _
    // Predicated region
    $region6: #{tpu_custom_call.1} parent=1 // pred_check
      _
    $region7: #{tpu_custom_call.1} parent=1 // pred_check_branch
      %30 = sbr.rel (0) target = $region9
    $region8: #{tpu_custom_call.1} parent=1 // pred_region
      %32 = vsyncadd [#allocation5], 0
      %s33 = sshll.u32 %s1, 4
      %s34 = int_to_ptr.hbm [resolvable:$true] %s33
      %s35 = sshll.u32 [#allocation4], 4
      %s36 = int_to_ptr.vmem [resolvable:$true] %s35
      %41 = dma.hbm_to_vmem [thread:$0]  %s34, 512, %s36, [#allocation5], 128, 128, 8
    $region9: #{tpu_custom_call.1} parent=1 // pred_fallthru
      _
    // Predicated region
    $region10: #{tpu_custom_call.1} parent=1 // pred_check
      _
    $region11: #{tpu_custom_call.1} parent=1 // pred_check_branch
      %43 = sbr.rel (0) target = $region13
    $region12: #{tpu_custom_call.1} parent=1 // pred_region
      _
    $region13: #{tpu_custom_call.1} parent=1 // pred_fallthru
      _
    // Predicated region
    $region14: #{tpu_custom_call.1} parent=1 // pred_check
      _
    $region15: #{tpu_custom_call.1} parent=1 // pred_check_branch
      %45 = sbr.rel (0) target = $region17
    $region16: #{tpu_custom_call.1} parent=1 // pred_region
      %47 = vsyncadd [#allocation5], 0
      %s48 = sshll.u32 %s3, 4
      %s49 = int_to_ptr.hbm [resolvable:$true] %s48
      %s50 = sshll.u32 [#allocation6], 4
      %s51 = int_to_ptr.vmem [resolvable:$true] %s50
      %56 = dma.hbm_to_vmem [thread:$0]  %s49, 2048, %s51, [#allocation5], 64, 64, 4
    $region17: #{tpu_custom_call.1} parent=1 // pred_fallthru
      _
    // Predicated region
    $region18: #{tpu_custom_call.1} parent=1 // pred_check
      _
    $region19: #{tpu_custom_call.1} parent=1 // pred_check_branch
      %58 = sbr.rel (0) target = $region21
    $region20: #{tpu_custom_call.1} parent=1 // pred_region
      _
    $region21: #{tpu_custom_call.1} parent=1 // pred_fallthru
      _
    // Predicated region
    $region22: #{tpu_custom_call.1} parent=1 // pred_check
      _
    $region23: #{tpu_custom_call.1} parent=1 // pred_check_branch
      %60 = sbr.rel (0) target = $region25
    $region24: #{tpu_custom_call.1} parent=1 // pred_region
      _
    $region25: #{tpu_custom_call.1} parent=1 // pred_fallthru
      _
    // Predicated region
    $region26: #{tpu_custom_call.1} parent=1 // pred_check
      _
    $region27: #{tpu_custom_call.1} parent=1 // pred_check_branch
      %62 = sbr.rel (0) target = $region29
    $region28: #{tpu_custom_call.1} parent=1 // pred_region
      _
    $region29: #{tpu_custom_call.1} parent=1 // pred_fallthru
      _
    // Predicated region
    $region30: #{tpu_custom_call.1} parent=1 // pred_check
      _
    $region31: #{tpu_custom_call.1} parent=1 // pred_check_branch
      %64 = sbr.rel (0) target = $region33
    $region32: #{tpu_custom_call.1} parent=1 // pred_region
      _
    $region33: #{tpu_custom_call.1} parent=1 // pred_fallthru
      _
    // Predicated region
    $region34: #{tpu_custom_call.1} parent=1 // pred_check
      _
    $region35: #{tpu_custom_call.1} parent=1 // pred_check_branch
      %66 = sbr.rel (0) target = $region37
    $region36: #{tpu_custom_call.1} parent=1 // pred_region
      _
    $region37: #{tpu_custom_call.1} parent=1 // pred_fallthru
      _
    // Predicated region
    $region38: #{tpu_custom_call.1} parent=1 // pred_check
      _
    $region39: #{tpu_custom_call.1} parent=1 // pred_check_branch
      %68 = sbr.rel (0) target = $region41
    $region40: #{tpu_custom_call.1} parent=1 // pred_region
      %70 = dma.done [#allocation3], 256
    $region41: #{tpu_custom_call.1} parent=1 // pred_fallthru
      _
    // Predicated region
    $region42: #{tpu_custom_call.1} parent=1 // pred_check
      _
    $region43: #{tpu_custom_call.1} parent=1 // pred_check_branch
      %72 = sbr.rel (0) target = $region45
    $region44: #{tpu_custom_call.1} parent=1 // pred_region
      %74 = dma.done [#allocation5], 512
    $region45: #{tpu_custom_call.1} parent=1 // pred_fallthru
      _
    // Predicated region
    $region46: #{tpu_custom_call.1} parent=1 // pred_check
      _
    $region47: #{tpu_custom_call.1} parent=1 // pred_check_branch
      %76 = sbr.rel (0) target = $region49
    $region48: #{tpu_custom_call.1} parent=1 // pred_region
      %78 = dma.done [#allocation5], 2048
    $region49: #{tpu_custom_call.1} parent=1 // pred_fallthru
      _
    %v80 = vld [vmem:[#allocation2] sm:$0xff]
    %v81 = vld [vmem:[#allocation2 + $0x8] sm:$0xff]
    %v82 = vpack.c.bf16 %v81, %v80
    %v83 = vld [vmem:[#allocation4] sm:$0xff]
    %v84 = vld [vmem:[#allocation4 + $0x8] sm:$0xff]
    %v85 = vld [vmem:[#allocation4 + $0x10] sm:$0xff]
    %v86 = vld [vmem:[#allocation4 + $0x18] sm:$0xff]
    %v87 = vld [vmem:[%s2] sm:$0x3]
    %v89 = vperm.slane %v87, 0
    %v90 = vperm.slane %v87, 1
    %v97 = vunpack.c.l.b16 %v83
    %v98 = vunpack.c.h.b16 %v83
    %v99 = vunpack.c.l.b16 %v84
    %v100 = vunpack.c.h.b16 %v84
    %v101 = vunpack.c.l.b16 %v85
    %v102 = vunpack.c.h.b16 %v85
    %v103 = vunpack.c.l.b16 %v86
    %v104 = vunpack.c.h.b16 %v86
    %v105 = vpack.c.b16 %v99, %v97
    %v106 = vpack.c.b16 %v100, %v98
    %v107 = vpack.c.b16 %v103, %v101
    %v108 = vpack.c.b16 %v104, %v102
    %vm113 = vcmask 261120
    %v115 = vsel %vm113, %v82, 0
    %117 = vmatpush.bf16.msra.mxu0 0
    %118 = vmatpush.bf16.msra.mxu0 0
    %119 = vmatpush.bf16.msra.mxu0 0
    %120 = vmatpush.bf16.msra.mxu0 0
    %121 = vmatpush.bf16.msra.mxu0 0
    %122 = vmatpush.bf16.msra.mxu0 0
    %123 = vmatpush.bf16.msra.mxu0 %v107
    %124 = vmatpush.bf16.msra.mxu0 %v105
    %125 = vmatmul.bf16.gmra.mxu0 %v115
    %v126 = vpop.f32.mrf.mxu0
    %v127 = vadd.f32 %v89, %v126
    %v128 = vpop.f32.mrf.mxu0
    %v129 = vadd.f32 %v89, %v128
    %130 = vdwg.mxu0
    %131 = vmatpush.bf16.msra.mxu0 0
    %132 = vmatpush.bf16.msra.mxu0 0
    %133 = vmatpush.bf16.msra.mxu0 0
    %134 = vmatpush.bf16.msra.mxu0 0
    %135 = vmatpush.bf16.msra.mxu0 0
    %136 = vmatpush.bf16.msra.mxu0 0
    %137 = vmatpush.bf16.msra.mxu0 %v108
    %138 = vmatpush.bf16.msra.mxu0 %v106
    %139 = vmatmul.bf16.gmra.mxu0 %v115
    %v140 = vpop.f32.mrf.mxu0
    %v141 = vadd.f32 %v90, %v140
    %v142 = vpop.f32.mrf.mxu0
    %v143 = vadd.f32 %v90, %v142
    %144 = vdwg.mxu0
    %v145 = vmax.f32 %v127, 0.0
    %v146 = vmax.f32 %v141, 0.0
    %v147 = vmax.f32 %v129, 0.0
    %v148 = vmax.f32 %v143, 0.0
    %v149 = vpack.c.bf16 %v147, %v145
    %v150 = vpack.c.bf16 %v148, %v146
    %v151 = vld [vmem:[#allocation6] sm:$0xf]
    %v152 = vld [vmem:[#allocation6 + $0x4] sm:$0xf]
    %v153 = vld [vmem:[#allocation6 + $0x8] sm:$0xf]
    %v154 = vld [vmem:[#allocation6 + $0xc] sm:$0xf]
    %v155 = vld [vmem:[#allocation6 + $0x10] sm:$0xf]
    %v156 = vld [vmem:[#allocation6 + $0x14] sm:$0xf]
    %v157 = vld [vmem:[#allocation6 + $0x18] sm:$0xf]
    %v158 = vld [vmem:[#allocation6 + $0x1c] sm:$0xf]
    %v159 = vld [vmem:[#allocation6 + $0x20] sm:$0xf]
    %v160 = vld [vmem:[#allocation6 + $0x24] sm:$0xf]
    %v161 = vld [vmem:[#allocation6 + $0x28] sm:$0xf]
    %v162 = vld [vmem:[#allocation6 + $0x2c] sm:$0xf]
    %v163 = vld [vmem:[#allocation6 + $0x30] sm:$0xf]
    %v164 = vld [vmem:[#allocation6 + $0x34] sm:$0xf]
    %v165 = vld [vmem:[#allocation6 + $0x38] sm:$0xf]
    %v166 = vld [vmem:[#allocation6 + $0x3c] sm:$0xf]
    %v167 = vld [vmem:[#allocation6 + $0x40] sm:$0xf]
    %v168 = vld [vmem:[#allocation6 + $0x44] sm:$0xf]
    %v169 = vld [vmem:[#allocation6 + $0x48] sm:$0xf]
    %v170 = vld [vmem:[#allocation6 + $0x4c] sm:$0xf]
    %v171 = vld [vmem:[#allocation6 + $0x50] sm:$0xf]
    %v172 = vld [vmem:[#allocation6 + $0x54] sm:$0xf]
    %v173 = vld [vmem:[#allocation6 + $0x58] sm:$0xf]
    %v174 = vld [vmem:[#allocation6 + $0x5c] sm:$0xf]
    %v175 = vld [vmem:[#allocation6 + $0x60] sm:$0xf]
    %v176 = vld [vmem:[#allocation6 + $0x64] sm:$0xf]
    %v177 = vld [vmem:[#allocation6 + $0x68] sm:$0xf]
    %v178 = vld [vmem:[#allocation6 + $0x6c] sm:$0xf]
    %v179 = vld [vmem:[#allocation6 + $0x70] sm:$0xf]
    %v180 = vld [vmem:[#allocation6 + $0x74] sm:$0xf]
    %v181 = vld [vmem:[#allocation6 + $0x78] sm:$0xf]
    %v182 = vld [vmem:[#allocation6 + $0x7c] sm:$0xf]
    %v183 = vld [vmem:[%s4] sm:$0x1]
    %v185 = vperm.slane %v183, 0
    %v219 = vunpack.c.l.b16 %v151
    %v220 = vunpack.c.l.b16 %v152
    %v221 = vunpack.c.l.b16 %v153
    %v222 = vunpack.c.l.b16 %v154
    %v223 = vunpack.c.l.b16 %v155
    %v224 = vunpack.c.l.b16 %v156
    %v225 = vunpack.c.l.b16 %v157
    %v226 = vunpack.c.l.b16 %v158
    %v227 = vunpack.c.l.b16 %v159
    %v228 = vunpack.c.l.b16 %v160
    %v229 = vunpack.c.l.b16 %v161
    %v230 = vunpack.c.l.b16 %v162
    %v231 = vunpack.c.l.b16 %v163
    %v232 = vunpack.c.l.b16 %v164
    %v233 = vunpack.c.l.b16 %v165
    %v234 = vunpack.c.l.b16 %v166
    %v235 = vunpack.c.l.b16 %v167
    %v236 = vunpack.c.l.b16 %v168
    %v237 = vunpack.c.l.b16 %v169
    %v238 = vunpack.c.l.b16 %v170
    %v239 = vunpack.c.l.b16 %v171
    %v240 = vunpack.c.l.b16 %v172
    %v241 = vunpack.c.l.b16 %v173
    %v242 = vunpack.c.l.b16 %v174
    %v243 = vunpack.c.l.b16 %v175
    %v244 = vunpack.c.l.b16 %v176
    %v245 = vunpack.c.l.b16 %v177
    %v246 = vunpack.c.l.b16 %v178
    %v247 = vunpack.c.l.b16 %v179
    %v248 = vunpack.c.l.b16 %v180
    %v249 = vunpack.c.l.b16 %v181
    %v250 = vunpack.c.l.b16 %v182
    %v251 = vpack.c.b16 %v220, %v219
    %v252 = vpack.c.b16 %v222, %v221
    %v253 = vpack.c.b16 %v224, %v223
    %v254 = vpack.c.b16 %v226, %v225
    %v255 = vpack.c.b16 %v228, %v227
    %v256 = vpack.c.b16 %v230, %v229
    %v257 = vpack.c.b16 %v232, %v231
    %v258 = vpack.c.b16 %v234, %v233
    %v259 = vpack.c.b16 %v236, %v235
    %v260 = vpack.c.b16 %v238, %v237
    %v261 = vpack.c.b16 %v240, %v239
    %v262 = vpack.c.b16 %v242, %v241
    %v263 = vpack.c.b16 %v244, %v243
    %v264 = vpack.c.b16 %v246, %v245
    %v265 = vpack.c.b16 %v248, %v247
    %v266 = vpack.c.b16 %v250, %v249
    %283 = vmatpush.bf16.msra.mxu0 %v258
    %284 = vmatpush.bf16.msra.mxu0 %v257
    %285 = vmatpush.bf16.msra.mxu0 %v256
    %286 = vmatpush.bf16.msra.mxu0 %v255
    %287 = vmatpush.bf16.msra.mxu0 %v254
    %288 = vmatpush.bf16.msra.mxu0 %v253
    %289 = vmatpush.bf16.msra.mxu0 %v252
    %290 = vmatpush.bf16.msra.mxu0 %v251
    %291 = vmatmul.bf16.gmra.mxu0 %v149
    %v292 = vpop.f32.mrf.mxu0
    %v293 = vadd.f32 %v185, %v292
    %v294 = vpop.f32.mrf.mxu0
    %v295 = vadd.f32 %v185, %v294
    %296 = vdwg.mxu0
    %297 = vmatpush.bf16.msra.mxu0 %v266
    %298 = vmatpush.bf16.msra.mxu0 %v265
    %299 = vmatpush.bf16.msra.mxu0 %v264
    %300 = vmatpush.bf16.msra.mxu0 %v263
    %301 = vmatpush.bf16.msra.mxu0 %v262
    %302 = vmatpush.bf16.msra.mxu0 %v261
    %303 = vmatpush.bf16.msra.mxu0 %v260
    %304 = vmatpush.bf16.msra.mxu0 %v259
    %305 = vmatmul.bf16.gmra.mxu0 %v150
    %v306 = vpop.f32.mrf.mxu0
    %v307 = vadd.f32 %v293, %v306
    %v308 = vpop.f32.mrf.mxu0
    %v309 = vadd.f32 %v295, %v308
    %310 = vdwg.mxu0
    %v311 = vmax.f32 %v307, 0.0
    %v312 = vmax.f32 %v309, 0.0
    %v313 = vpack.c.bf16 %v312, %v311
    %v314 = vld [vmem:[%s5] sm:$0xf]
    %v315 = vld [vmem:[%s5 + $0x4] sm:$0xf]
    %v316 = vld [vmem:[%s5 + $0x8] sm:$0xf]
    %v317 = vld [vmem:[%s5 + $0xc] sm:$0xf]
    %v318 = vld [vmem:[%s5 + $0x10] sm:$0xf]
    %v319 = vld [vmem:[%s5 + $0x14] sm:$0xf]
    %v320 = vld [vmem:[%s5 + $0x18] sm:$0xf]
    %v321 = vld [vmem:[%s5 + $0x1c] sm:$0xf]
    %v322 = vld [vmem:[%s5 + $0x20] sm:$0xf]
    %v323 = vld [vmem:[%s5 + $0x24] sm:$0xf]
    %v324 = vld [vmem:[%s5 + $0x28] sm:$0xf]
    %v325 = vld [vmem:[%s5 + $0x2c] sm:$0xf]
    %v326 = vld [vmem:[%s5 + $0x30] sm:$0xf]
    %v327 = vld [vmem:[%s5 + $0x34] sm:$0xf]
    %v328 = vld [vmem:[%s5 + $0x38] sm:$0xf]
    %v329 = vld [vmem:[%s5 + $0x3c] sm:$0xf]
    %v330 = vld [vmem:[%s6] sm:$0x1]
    %v332 = vperm.slane %v330, 0
    %v350 = vunpack.c.l.b16 %v314
    %v351 = vunpack.c.l.b16 %v315
    %v352 = vunpack.c.l.b16 %v316
    %v353 = vunpack.c.l.b16 %v317
    %v354 = vunpack.c.l.b16 %v318
    %v355 = vunpack.c.l.b16 %v319
    %v356 = vunpack.c.l.b16 %v320
    %v357 = vunpack.c.l.b16 %v321
    %v358 = vunpack.c.l.b16 %v322
    %v359 = vunpack.c.l.b16 %v323
    %v360 = vunpack.c.l.b16 %v324
    %v361 = vunpack.c.l.b16 %v325
    %v362 = vunpack.c.l.b16 %v326
    %v363 = vunpack.c.l.b16 %v327
    %v364 = vunpack.c.l.b16 %v328
    %v365 = vunpack.c.l.b16 %v329
    %v366 = vpack.c.b16 %v351, %v350
    %v367 = vpack.c.b16 %v353, %v352
    %v368 = vpack.c.b16 %v355, %v354
    %v369 = vpack.c.b16 %v357, %v356
    %v370 = vpack.c.b16 %v359, %v358
    %v371 = vpack.c.b16 %v361, %v360
    %v372 = vpack.c.b16 %v363, %v362
    %v373 = vpack.c.b16 %v365, %v364
    %382 = vmatpush.bf16.msra.mxu0 %v373
    %383 = vmatpush.bf16.msra.mxu0 %v372
    %384 = vmatpush.bf16.msra.mxu0 %v371
    %385 = vmatpush.bf16.msra.mxu0 %v370
    %386 = vmatpush.bf16.msra.mxu0 %v369
    %387 = vmatpush.bf16.msra.mxu0 %v368
    %388 = vmatpush.bf16.msra.mxu0 %v367
    %389 = vmatpush.bf16.msra.mxu0 %v366
    %390 = vmatmul.bf16.gmra.mxu0 %v313
    %v391 = vpop.f32.mrf.mxu0
    %v392 = vadd.f32 %v332, %v391
    %v393 = vpop.f32.mrf.mxu0
    %v394 = vadd.f32 %v332, %v393
    %395 = vdwg.mxu0
    %v396 = vmax.f32 %v392, 0.0
    %v397 = vmax.f32 %v394, 0.0
    %v398 = vpack.c.bf16 %v397, %v396
    %v399 = vld [vmem:[%s7] sm:$0xf]
    %v400 = vld [vmem:[%s7 + $0x4] sm:$0xf]
    %v401 = vld [vmem:[%s7 + $0x8] sm:$0xf]
    %v402 = vld [vmem:[%s7 + $0xc] sm:$0xf]
    %v403 = vld [vmem:[%s7 + $0x10] sm:$0xf]
    %v404 = vld [vmem:[%s7 + $0x14] sm:$0xf]
    %v405 = vld [vmem:[%s7 + $0x18] sm:$0xf]
    %v406 = vld [vmem:[%s7 + $0x1c] sm:$0xf]
    %v407 = vld [vmem:[%s7 + $0x20] sm:$0xf]
    %v408 = vld [vmem:[%s7 + $0x24] sm:$0xf]
    %v409 = vld [vmem:[%s7 + $0x28] sm:$0xf]
    %v410 = vld [vmem:[%s7 + $0x2c] sm:$0xf]
    %v411 = vld [vmem:[%s7 + $0x30] sm:$0xf]
    %v412 = vld [vmem:[%s7 + $0x34] sm:$0xf]
    %v413 = vld [vmem:[%s7 + $0x38] sm:$0xf]
    %v414 = vld [vmem:[%s7 + $0x3c] sm:$0xf]
    %v415 = vld [vmem:[%s8] sm:$0x1]
    %v417 = vperm.slane %v415, 0
    %v435 = vunpack.c.l.b16 %v399
    %v436 = vunpack.c.l.b16 %v400
    %v437 = vunpack.c.l.b16 %v401
    %v438 = vunpack.c.l.b16 %v402
    %v439 = vunpack.c.l.b16 %v403
    %v440 = vunpack.c.l.b16 %v404
    %v441 = vunpack.c.l.b16 %v405
    %v442 = vunpack.c.l.b16 %v406
    %v443 = vunpack.c.l.b16 %v407
    %v444 = vunpack.c.l.b16 %v408
    %v445 = vunpack.c.l.b16 %v409
    %v446 = vunpack.c.l.b16 %v410
    %v447 = vunpack.c.l.b16 %v411
    %v448 = vunpack.c.l.b16 %v412
    %v449 = vunpack.c.l.b16 %v413
    %v450 = vunpack.c.l.b16 %v414
    %v451 = vpack.c.b16 %v436, %v435
    %v452 = vpack.c.b16 %v438, %v437
    %v453 = vpack.c.b16 %v440, %v439
    %v454 = vpack.c.b16 %v442, %v441
    %v455 = vpack.c.b16 %v444, %v443
    %v456 = vpack.c.b16 %v446, %v445
    %v457 = vpack.c.b16 %v448, %v447
    %v458 = vpack.c.b16 %v450, %v449
    %467 = vmatpush.bf16.msra.mxu0 %v458
    %468 = vmatpush.bf16.msra.mxu0 %v457
    %469 = vmatpush.bf16.msra.mxu0 %v456
    %470 = vmatpush.bf16.msra.mxu0 %v455
    %471 = vmatpush.bf16.msra.mxu0 %v454
    %472 = vmatpush.bf16.msra.mxu0 %v453
    %473 = vmatpush.bf16.msra.mxu0 %v452
    %474 = vmatpush.bf16.msra.mxu0 %v451
    %475 = vmatmul.bf16.gmra.mxu0 %v398
    %v476 = vpop.f32.mrf.mxu0
    %v477 = vadd.f32 %v417, %v476
    %v478 = vpop.f32.mrf.mxu0
    %v479 = vadd.f32 %v417, %v478
    %480 = vdwg.mxu0
    %vm481 = vcmask 48128
    %482 = vst.msk [vmem:[%s9] sm:$0xff] %vm481, %v477
    %483 = vst.msk [vmem:[%s9 + $0x8] sm:$0xff] %vm481, %v479
    // Predicated region
    $region50: #{tpu_custom_call.1} parent=1 // pred_check
      _
    $region51: #{tpu_custom_call.1} parent=1 // pred_check_branch
      %485 = sbr.rel (0) target = $region53
    $region52: #{tpu_custom_call.1} parent=1 // pred_region
      _
    $region53: #{tpu_custom_call.1} parent=1 // pred_fallthru
      _
    // Predicated region
    $region54: #{tpu_custom_call.1} parent=1 // pred_check
      _
    $region55: #{tpu_custom_call.1} parent=1 // pred_check_branch
      %487 = sbr.rel (0) target = $region57
    $region56: #{tpu_custom_call.1} parent=1 // pred_region
      _
    $region57: #{tpu_custom_call.1} parent=1 // pred_fallthru
      _
    %488 = vsyncpa [#allocation3], 1
    %489 = vsyncpa [#allocation5], 1

</llo_original>
